<compile_context>
chip_gen: v5e
topology: v5e:2x2
jax: 0.10.0
libtpu: 0.0.40
codegen_flags: <defaults>
</compile_context>

<pallas_src>
import jax
import jax.numpy as jnp
from jax.experimental import pallas as pl
from jax.experimental.pallas import tpu as pltpu


def _rnn_fc_kernel(x_ref, wih_t_ref, whh_t_ref, b_ref, wfc_t_ref, bfc_ref,
                   out_ref, xw_ref):
    T, B, I = x_ref.shape
    H = whh_t_ref.shape[0]

    # Input projection for ALL timesteps in one MXU call (independent of recurrence):
    #   xw = x.reshape(T*B, I) @ W_ih^T + (b_ih + b_hh)
    xw = jnp.dot(x_ref[...].reshape(T * B, I), wih_t_ref[...],
                 preferred_element_type=jnp.float32) + b_ref[...]
    xw_ref[...] = xw.reshape(T, B, H)

    # Sequential recurrence: h_t = tanh(xw[t] + h_{t-1} @ W_hh^T)
    h0 = jnp.zeros((B, H), jnp.float32)

    def step(t, h):
        return jnp.tanh(
            xw_ref[t]
            + jnp.dot(h, whh_t_ref[...], preferred_element_type=jnp.float32)
        )

    h_last = jax.lax.fori_loop(0, T, step, h0, unroll=True)

    # fc(out[:, -1, :]) = h_T @ W_fc^T + b_fc
    y = jnp.dot(h_last, wfc_t_ref[...], preferred_element_type=jnp.float32) \
        + bfc_ref[...]
    out_ref[...] = y.astype(out_ref.dtype)


def dummy_rnn_forward(x_btf, w_ih, w_hh, b_ih, b_hh, w_fc, b_fc):
    """x_btf: (B, T, I) float32 (PyTorch batch_first layout). Returns (B, O)."""
    B, T, I = x_btf.shape
    H = w_ih.shape[0]
    O = w_fc.shape[0]

    # Layout / algebra prep done once in the wrapper (free relative to the kernel):
    x_tbf = jnp.transpose(x_btf, (1, 0, 2))   # (T, B, I) -> time-major
    wih_t = jnp.transpose(w_ih)               # (I, H)
    whh_t = jnp.transpose(w_hh)               # (H, H), pre-transposed once
    wfc_t = jnp.transpose(w_fc)               # (H, O)
    b_rnn = (b_ih + b_hh).reshape(1, H)       # fold the two RNN biases
    b_fc2 = b_fc.reshape(1, O)

    # No grid: everything (a few KB) is resident in VMEM for a single invocation.
    return pl.pallas_call(
        _rnn_fc_kernel,
        out_shape=jax.ShapeDtypeStruct((B, O), jnp.float32),
        scratch_shapes=[pltpu.VMEM((T, B, H), jnp.float32)],  # hoisted x@W_ih^T
    )(x_tbf, wih_t, whh_t, b_rnn, wfc_t, b_fc2)


def _reference(x_btf, w_ih, w_hh, b_ih, b_hh, w_fc, b_fc):
    B, T, I = x_btf.shape
    H = w_ih.shape[0]
    h = jnp.zeros((B, H), jnp.float32)

    def step(h, x_t):
        h_new = jnp.tanh(x_t @ w_ih.T + b_ih + h @ w_hh.T + b_hh)
        return h_new, None

    h_last, _ = jax.lax.scan(step, h, jnp.transpose(x_btf, (1, 0, 2)))
    return h_last @ w_fc.T + b_fc


if __name__ == "__main__":
    # TODO(synk): only num_layers=1 is implemented (matches the module default).
    B, T, I, H, O = 2, 8, 4, 32, 8

    key = jax.random.PRNGKey(0)
    ks = jax.random.split(key, 7)
    s = 1.0 / jnp.sqrt(H)
    x    = jax.random.normal(ks[0], (B, T, I), jnp.float32)
    w_ih = jax.random.uniform(ks[1], (H, I), jnp.float32, -s, s)
    w_hh = jax.random.uniform(ks[2], (H, H), jnp.float32, -s, s)
    b_ih = jax.random.uniform(ks[3], (H,),   jnp.float32, -s, s)
    b_hh = jax.random.uniform(ks[4], (H,),   jnp.float32, -s, s)
    w_fc = jax.random.uniform(ks[5], (O, H), jnp.float32, -s, s)
    b_fc = jax.random.uniform(ks[6], (O,),   jnp.float32, -s, s)

    out = dummy_rnn_forward(x, w_ih, w_hh, b_ih, b_hh, w_fc, b_fc)
    out = jax.block_until_ready(out)

    ref = _reference(x, w_ih, w_hh, b_ih, b_hh, w_fc, b_fc)
    assert out.shape == (B, O)
    assert jnp.allclose(out, ref, atol=1e-5, rtol=1e-5), "mismatch vs JAX reference"

    print("KERNEL_OK")
</pallas_src>

<mosaic_0001>
module attributes {stable_mosaic.version = 11 : i64} {
  func.func @_rnn_fc_kernel(%arg0: memref<8x2x4xf32, #tpu.memory_space<vmem>>, %arg1: memref<4x32xf32, #tpu.memory_space<vmem>>, %arg2: memref<32x32xf32, #tpu.memory_space<vmem>>, %arg3: memref<1x32xf32, #tpu.memory_space<vmem>>, %arg4: memref<32x8xf32, #tpu.memory_space<vmem>>, %arg5: memref<1x8xf32, #tpu.memory_space<vmem>>, %arg6: memref<2x8xf32, #tpu.memory_space<vmem>>, %arg7: memref<8x2x32xf32, #tpu.memory_space<vmem>>) attributes {dimension_semantics = [], scalar_prefetch = 0 : i64, scratch_operands = 1 : i64, tpu.core_type = #tpu.core_type<tc>} {
    %c0 = arith.constant 0 : index
    %c0_0 = arith.constant 0 : index
    %c0_1 = arith.constant 0 : index
    %0 = vector.load %arg0[%c0, %c0_0, %c0_1] : memref<8x2x4xf32, #tpu.memory_space<vmem>>, vector<8x2x4xf32>
    %1 = vector.shape_cast %0 : vector<8x2x4xf32> to vector<16x4xf32>
    %c0_2 = arith.constant 0 : index
    %c0_3 = arith.constant 0 : index
    %2 = vector.load %arg1[%c0_2, %c0_3] : memref<4x32xf32, #tpu.memory_space<vmem>>, vector<4x32xf32>
    %cst = arith.constant dense<0.000000e+00> : vector<16x32xf32>
    %3 = tpu.matmul %1, %2, %cst {dimension_numbers = #tpu.dot_dimension_numbers<[1], [0], [0], [1], [0, 0, 1, 1], [], []>} : vector<16x4xf32>, vector<4x32xf32>, vector<16x32xf32> -> vector<16x32xf32>
    %c0_4 = arith.constant 0 : index
    %c0_5 = arith.constant 0 : index
    %4 = vector.load %arg3[%c0_4, %c0_5] : memref<1x32xf32, #tpu.memory_space<vmem>>, vector<1x32xf32>
    %5 = vector.broadcast %4 : vector<1x32xf32> to vector<16x32xf32>
    %6 = arith.addf %3, %5 : vector<16x32xf32>
    %7 = vector.shape_cast %6 : vector<16x32xf32> to vector<8x2x32xf32>
    %c0_6 = arith.constant 0 : index
    %c0_7 = arith.constant 0 : index
    %c0_8 = arith.constant 0 : index
    %8 = vector.load %arg7[%c0_6, %c0_7, %c0_8] : memref<8x2x32xf32, #tpu.memory_space<vmem>>, vector<8x2x32xf32>
    tpu.vector_store %arg7[%c0_6, %c0_7, %c0_8], %7 {strides = array<i32>} : memref<8x2x32xf32, #tpu.memory_space<vmem>>, vector<8x2x32xf32>,
    %cst_9 = arith.constant 0.000000e+00 : f32
    %9 = vector.broadcast %cst_9 : f32 to vector<2x32xf32>
    %c0_i32 = arith.constant 0 : i32
    %10 = arith.index_cast %c0_i32 : i32 to index
    %c0_10 = arith.constant 0 : index
    %c0_11 = arith.constant 0 : index
    %11 = vector.load %arg7[%10, %c0_10, %c0_11] : memref<8x2x32xf32, #tpu.memory_space<vmem>>, vector<1x2x32xf32>
    %12 = vector.shape_cast %11 : vector<1x2x32xf32> to vector<2x32xf32>
    %c0_12 = arith.constant 0 : index
    %c0_13 = arith.constant 0 : index
    %13 = vector.load %arg2[%c0_12, %c0_13] : memref<32x32xf32, #tpu.memory_space<vmem>>, vector<32x32xf32>
    %cst_14 = arith.constant dense<0.000000e+00> : vector<2x32xf32>
    %14 = tpu.matmul %9, %13, %cst_14 {dimension_numbers = #tpu.dot_dimension_numbers<[1], [0], [0], [1], [0, 0, 1, 1], [], []>} : vector<2x32xf32>, vector<32x32xf32>, vector<2x32xf32> -> vector<2x32xf32>
    %15 = arith.addf %12, %14 : vector<2x32xf32>
    %16 = math.tanh %15 : vector<2x32xf32>
    %c1_i32 = arith.constant 1 : i32
    %17 = arith.index_cast %c1_i32 : i32 to index
    %c0_15 = arith.constant 0 : index
    %c0_16 = arith.constant 0 : index
    %18 = vector.load %arg7[%17, %c0_15, %c0_16] : memref<8x2x32xf32, #tpu.memory_space<vmem>>, vector<1x2x32xf32>
    %19 = vector.shape_cast %18 : vector<1x2x32xf32> to vector<2x32xf32>
    %c0_17 = arith.constant 0 : index
    %c0_18 = arith.constant 0 : index
    %20 = vector.load %arg2[%c0_17, %c0_18] : memref<32x32xf32, #tpu.memory_space<vmem>>, vector<32x32xf32>
    %cst_19 = arith.constant dense<0.000000e+00> : vector<2x32xf32>
    %21 = tpu.matmul %16, %20, %cst_19 {dimension_numbers = #tpu.dot_dimension_numbers<[1], [0], [0], [1], [0, 0, 1, 1], [], []>} : vector<2x32xf32>, vector<32x32xf32>, vector<2x32xf32> -> vector<2x32xf32>
    %22 = arith.addf %19, %21 : vector<2x32xf32>
    %23 = math.tanh %22 : vector<2x32xf32>
    %c2_i32 = arith.constant 2 : i32
    %24 = arith.index_cast %c2_i32 : i32 to index
    %c0_20 = arith.constant 0 : index
    %c0_21 = arith.constant 0 : index
    %25 = vector.load %arg7[%24, %c0_20, %c0_21] : memref<8x2x32xf32, #tpu.memory_space<vmem>>, vector<1x2x32xf32>
    %26 = vector.shape_cast %25 : vector<1x2x32xf32> to vector<2x32xf32>
    %c0_22 = arith.constant 0 : index
    %c0_23 = arith.constant 0 : index
    %27 = vector.load %arg2[%c0_22, %c0_23] : memref<32x32xf32, #tpu.memory_space<vmem>>, vector<32x32xf32>
    %cst_24 = arith.constant dense<0.000000e+00> : vector<2x32xf32>
    %28 = tpu.matmul %23, %27, %cst_24 {dimension_numbers = #tpu.dot_dimension_numbers<[1], [0], [0], [1], [0, 0, 1, 1], [], []>} : vector<2x32xf32>, vector<32x32xf32>, vector<2x32xf32> -> vector<2x32xf32>
    %29 = arith.addf %26, %28 : vector<2x32xf32>
    %30 = math.tanh %29 : vector<2x32xf32>
    %c3_i32 = arith.constant 3 : i32
    %31 = arith.index_cast %c3_i32 : i32 to index
    %c0_25 = arith.constant 0 : index
    %c0_26 = arith.constant 0 : index
    %32 = vector.load %arg7[%31, %c0_25, %c0_26] : memref<8x2x32xf32, #tpu.memory_space<vmem>>, vector<1x2x32xf32>
    %33 = vector.shape_cast %32 : vector<1x2x32xf32> to vector<2x32xf32>
    %c0_27 = arith.constant 0 : index
    %c0_28 = arith.constant 0 : index
    %34 = vector.load %arg2[%c0_27, %c0_28] : memref<32x32xf32, #tpu.memory_space<vmem>>, vector<32x32xf32>
    %cst_29 = arith.constant dense<0.000000e+00> : vector<2x32xf32>
    %35 = tpu.matmul %30, %34, %cst_29 {dimension_numbers = #tpu.dot_dimension_numbers<[1], [0], [0], [1], [0, 0, 1, 1], [], []>} : vector<2x32xf32>, vector<32x32xf32>, vector<2x32xf32> -> vector<2x32xf32>
    %36 = arith.addf %33, %35 : vector<2x32xf32>
    %37 = math.tanh %36 : vector<2x32xf32>
    %c4_i32 = arith.constant 4 : i32
    %38 = arith.index_cast %c4_i32 : i32 to index
    %c0_30 = arith.constant 0 : index
    %c0_31 = arith.constant 0 : index
    %39 = vector.load %arg7[%38, %c0_30, %c0_31] : memref<8x2x32xf32, #tpu.memory_space<vmem>>, vector<1x2x32xf32>
    %40 = vector.shape_cast %39 : vector<1x2x32xf32> to vector<2x32xf32>
    %c0_32 = arith.constant 0 : index
    %c0_33 = arith.constant 0 : index
    %41 = vector.load %arg2[%c0_32, %c0_33] : memref<32x32xf32, #tpu.memory_space<vmem>>, vector<32x32xf32>
    %cst_34 = arith.constant dense<0.000000e+00> : vector<2x32xf32>
    %42 = tpu.matmul %37, %41, %cst_34 {dimension_numbers = #tpu.dot_dimension_numbers<[1], [0], [0], [1], [0, 0, 1, 1], [], []>} : vector<2x32xf32>, vector<32x32xf32>, vector<2x32xf32> -> vector<2x32xf32>
    %43 = arith.addf %40, %42 : vector<2x32xf32>
    %44 = math.tanh %43 : vector<2x32xf32>
    %c5_i32 = arith.constant 5 : i32
    %45 = arith.index_cast %c5_i32 : i32 to index
    %c0_35 = arith.constant 0 : index
    %c0_36 = arith.constant 0 : index
    %46 = vector.load %arg7[%45, %c0_35, %c0_36] : memref<8x2x32xf32, #tpu.memory_space<vmem>>, vector<1x2x32xf32>
    %47 = vector.shape_cast %46 : vector<1x2x32xf32> to vector<2x32xf32>
    %c0_37 = arith.constant 0 : index
    %c0_38 = arith.constant 0 : index
    %48 = vector.load %arg2[%c0_37, %c0_38] : memref<32x32xf32, #tpu.memory_space<vmem>>, vector<32x32xf32>
    %cst_39 = arith.constant dense<0.000000e+00> : vector<2x32xf32>
    %49 = tpu.matmul %44, %48, %cst_39 {dimension_numbers = #tpu.dot_dimension_numbers<[1], [0], [0], [1], [0, 0, 1, 1], [], []>} : vector<2x32xf32>, vector<32x32xf32>, vector<2x32xf32> -> vector<2x32xf32>
    %50 = arith.addf %47, %49 : vector<2x32xf32>
    %51 = math.tanh %50 : vector<2x32xf32>
    %c6_i32 = arith.constant 6 : i32
    %52 = arith.index_cast %c6_i32 : i32 to index
    %c0_40 = arith.constant 0 : index
    %c0_41 = arith.constant 0 : index
    %53 = vector.load %arg7[%52, %c0_40, %c0_41] : memref<8x2x32xf32, #tpu.memory_space<vmem>>, vector<1x2x32xf32>
    %54 = vector.shape_cast %53 : vector<1x2x32xf32> to vector<2x32xf32>
    %c0_42 = arith.constant 0 : index
    %c0_43 = arith.constant 0 : index
    %55 = vector.load %arg2[%c0_42, %c0_43] : memref<32x32xf32, #tpu.memory_space<vmem>>, vector<32x32xf32>
    %cst_44 = arith.constant dense<0.000000e+00> : vector<2x32xf32>
    %56 = tpu.matmul %51, %55, %cst_44 {dimension_numbers = #tpu.dot_dimension_numbers<[1], [0], [0], [1], [0, 0, 1, 1], [], []>} : vector<2x32xf32>, vector<32x32xf32>, vector<2x32xf32> -> vector<2x32xf32>
    %57 = arith.addf %54, %56 : vector<2x32xf32>
    %58 = math.tanh %57 : vector<2x32xf32>
    %c7_i32 = arith.constant 7 : i32
    %59 = arith.index_cast %c7_i32 : i32 to index
    %c0_45 = arith.constant 0 : index
    %c0_46 = arith.constant 0 : index
    %60 = vector.load %arg7[%59, %c0_45, %c0_46] : memref<8x2x32xf32, #tpu.memory_space<vmem>>, vector<1x2x32xf32>
    %61 = vector.shape_cast %60 : vector<1x2x32xf32> to vector<2x32xf32>
    %c0_47 = arith.constant 0 : index
    %c0_48 = arith.constant 0 : index
    %62 = vector.load %arg2[%c0_47, %c0_48] : memref<32x32xf32, #tpu.memory_space<vmem>>, vector<32x32xf32>
    %cst_49 = arith.constant dense<0.000000e+00> : vector<2x32xf32>
    %63 = tpu.matmul %58, %62, %cst_49 {dimension_numbers = #tpu.dot_dimension_numbers<[1], [0], [0], [1], [0, 0, 1, 1], [], []>} : vector<2x32xf32>, vector<32x32xf32>, vector<2x32xf32> -> vector<2x32xf32>
    %64 = arith.addf %61, %63 : vector<2x32xf32>
    %65 = math.tanh %64 : vector<2x32xf32>
    %c8_i32 = arith.constant 8 : i32
    %c0_50 = arith.constant 0 : index
    %c0_51 = arith.constant 0 : index
    %66 = vector.load %arg4[%c0_50, %c0_51] : memref<32x8xf32, #tpu.memory_space<vmem>>, vector<32x8xf32>
    %cst_52 = arith.constant dense<0.000000e+00> : vector<2x8xf32>
    %67 = tpu.matmul %65, %66, %cst_52 {dimension_numbers = #tpu.dot_dimension_numbers<[1], [0], [0], [1], [0, 0, 1, 1], [], []>} : vector<2x32xf32>, vector<32x8xf32>, vector<2x8xf32> -> vector<2x8xf32>
    %c0_53 = arith.constant 0 : index
    %c0_54 = arith.constant 0 : index
    %68 = vector.load %arg5[%c0_53, %c0_54] : memref<1x8xf32, #tpu.memory_space<vmem>>, vector<1x8xf32>
    %69 = vector.broadcast %68 : vector<1x8xf32> to vector<2x8xf32>
    %70 = arith.addf %67, %69 : vector<2x8xf32>
    %c0_55 = arith.constant 0 : index
    %c0_56 = arith.constant 0 : index
    %71 = vector.load %arg6[%c0_55, %c0_56] : memref<2x8xf32, #tpu.memory_space<vmem>>, vector<2x8xf32>
    tpu.vector_store %arg6[%c0_55, %c0_56], %70 {strides = array<i32>} : memref<2x8xf32, #tpu.memory_space<vmem>>, vector<2x8xf32>,
    return
  }
}

</mosaic_0001>

<llo_original>
// kernel: tpu_custom_call.1
$region0: #{tpu_custom_call.1}
  #allocation0 [shape = 'u32[]', space=smem, size = 0x4, offset = 0x4, fixed_abs, tag = 'smem constant byte address 0x4 - core index']
  #allocation1 [shape = 'u32[72,128]{1,0:T(1,128)}', space=vmem, size = 0x9000, scoped, tag = 'internal scratch']
  #allocation2 [shape = 'f32[8,2,32]{2,1,0:T(2,128)}', space=vmem, size = 0x2000, scoped, tag = 'scratch operand']
  %s0 = inlined_call_operand.vmem [shape: f32[8,2,4], index: 0, kind: input, shape index: {}]
  %s1 = inlined_call_operand.vmem [shape: f32[4,32], index: 1, kind: input, shape index: {}]
  %s2 = inlined_call_operand.vmem [shape: f32[32,32], index: 2, kind: input, shape index: {}]
  %s3 = inlined_call_operand.vmem [shape: f32[1,32], index: 3, kind: input, shape index: {}]
  %s4 = inlined_call_operand.vmem [shape: f32[32,8], index: 4, kind: input, shape index: {}]
  %s5 = inlined_call_operand.vmem [shape: f32[1,8], index: 5, kind: input, shape index: {}]
  %s6 = inlined_call_operand.hbm [shape: f32[2,8], index: 6, kind: output, shape index: {}]
  %s7 = sld [smem:[#allocation0]]
  $region34: #{tpu_custom_call.1} parent=0
    _
  %s9 = ssub.s32 1, %s7
  %s10 = scalar_select 0, %s9, %s7
  $region1: #{tpu_custom_call.1} parent=0
    #allocation3 [shape = 'u8[1024]{0}', space=vmem, size = 0x400, scoped, tag = 'output window, operand 0, single buffered']
    #allocation4 [shape = 's32[1]{0}', space=sflag, size = 0x4, scoped, tag = 'scoped memory for tpu_custom_call.1']
    %11 = vsyncpa [#allocation4], 0
    // Predicated region
    $region2: #{tpu_custom_call.1} parent=1 // pred_check
      _
    $region3: #{tpu_custom_call.1} parent=1 // pred_check_branch
      %13 = sbr.rel (0) target = $region5
    $region4: #{tpu_custom_call.1} parent=1 // pred_region
      _
    $region5: #{tpu_custom_call.1} parent=1 // pred_fallthru
      _
    // Predicated region
    $region6: #{tpu_custom_call.1} parent=1 // pred_check
      _
    $region7: #{tpu_custom_call.1} parent=1 // pred_check_branch
      %15 = sbr.rel (0) target = $region9
    $region8: #{tpu_custom_call.1} parent=1 // pred_region
      _
    $region9: #{tpu_custom_call.1} parent=1 // pred_fallthru
      _
    // Predicated region
    $region10: #{tpu_custom_call.1} parent=1 // pred_check
      _
    $region11: #{tpu_custom_call.1} parent=1 // pred_check_branch
      %17 = sbr.rel (0) target = $region13
    $region12: #{tpu_custom_call.1} parent=1 // pred_region
      _
    $region13: #{tpu_custom_call.1} parent=1 // pred_fallthru
      _
    // Predicated region
    $region14: #{tpu_custom_call.1} parent=1 // pred_check
      _
    $region15: #{tpu_custom_call.1} parent=1 // pred_check_branch
      %19 = sbr.rel (0) target = $region17
    $region16: #{tpu_custom_call.1} parent=1 // pred_region
      _
    $region17: #{tpu_custom_call.1} parent=1 // pred_fallthru
      _
    // Predicated region
    $region18: #{tpu_custom_call.1} parent=1 // pred_check
      _
    $region19: #{tpu_custom_call.1} parent=1 // pred_check_branch
      %21 = sbr.rel (0) target = $region21
    $region20: #{tpu_custom_call.1} parent=1 // pred_region
      _
    $region21: #{tpu_custom_call.1} parent=1 // pred_fallthru
      _
    // Predicated region
    $region22: #{tpu_custom_call.1} parent=1 // pred_check
      _
    $region23: #{tpu_custom_call.1} parent=1 // pred_check_branch
      %23 = sbr.rel (0) target = $region25
    $region24: #{tpu_custom_call.1} parent=1 // pred_region
      _
    $region25: #{tpu_custom_call.1} parent=1 // pred_fallthru
      _
    %v24 = vld [vmem:[%s0] sm:$0x3]
    %v25 = vld [vmem:[%s0 + $0x2] sm:$0x3]
    %v26 = vld [vmem:[%s0 + $0x4] sm:$0x3]
    %v27 = vld [vmem:[%s0 + $0x6] sm:$0x3]
    %v28 = vld [vmem:[%s0 + $0x8] sm:$0x3]
    %v29 = vld [vmem:[%s0 + $0xa] sm:$0x3]
    %v30 = vld [vmem:[%s0 + $0xc] sm:$0x3]
    %v31 = vld [vmem:[%s0 + $0xe] sm:$0x3]
    %v32 = vld [vmem:[%s1] sm:$0xf]
    %v33 = vld [vmem:[%s3] sm:$0x1]
    %v35 = vperm.slane %v33, 0
    %45 = vst [vmem:[#allocation1] ss:$4 sm:$0xff] %v24
    %s46 = scalar_lea.vmem [#allocation1], 1
    %47 = vst [vmem:[%s46] ss:$4 sm:$0xff] %v25
    %s48 = scalar_lea.vmem [#allocation1], 2
    %49 = vst [vmem:[%s48] ss:$4 sm:$0xff] %v26
    %s50 = scalar_lea.vmem [#allocation1], 3
    %51 = vst [vmem:[%s50] ss:$4 sm:$0xff] %v27
    %s52 = scalar_lea.vmem [#allocation1], 32
    %53 = vst [vmem:[%s52] ss:$4 sm:$0xff] %v28
    %s54 = scalar_lea.vmem [#allocation1], 33
    %55 = vst [vmem:[%s54] ss:$4 sm:$0xff] %v29
    %s56 = scalar_lea.vmem [#allocation1], 34
    %57 = vst [vmem:[%s56] ss:$4 sm:$0xff] %v30
    %s58 = scalar_lea.vmem [#allocation1], 35
    %59 = vst [vmem:[%s58] ss:$4 sm:$0xff] %v31
    %v60 = vld.sshfl [vmem:[#allocation1] sm:$0xff pattern:$0x73625140]
    %v61 = vld.sshfl [vmem:[#allocation1 + $0x20] sm:$0xff pattern:$0x73625140]
    %vm62 = vcmask 31744
    %v63 = vsel %vm62, %v60, 0
    %v65 = vsel %vm62, %v61, 0
    %vm67 = vcmask 1043456
    %v69 = vsel %vm67, %v32, 0
    %71 = vmatpush.msra.mxu0 0.0
    %72 = vmatpush.msra.mxu0 0.0
    %73 = vmatpush.msra.mxu0 0.0
    %74 = vmatpush.msra.mxu0 0.0
    %75 = vmatpush.msra.mxu0 0.0
    %76 = vmatpush.msra.mxu0 0.0
    %77 = vmatpush.msra.mxu0 0.0
    %78 = vmatpush.msra.mxu0 0.0
    %79 = vmatpush.msra.mxu0 0.0
    %80 = vmatpush.msra.mxu0 0.0
    %81 = vmatpush.msra.mxu0 0.0
    %82 = vmatpush.msra.mxu0 0.0
    %83 = vmatpush.msra.mxu0 0.0
    %84 = vmatpush.msra.mxu0 0.0
    %85 = vmatpush.msra.mxu0 0.0
    %86 = vmatpush.msra.mxu0 %v69
    %87 = vmatmul.f32.gmra.mxu0 %v63
    %v88 = vpop.f32.mrf.mxu0
    %v89 = vadd.f32 %v35, %v88
    %90 = vmatmul.f32.gmra.mxu0 %v65
    %v91 = vpop.f32.mrf.mxu0
    %v92 = vadd.f32 %v35, %v91
    %93 = vdwg.mxu0
    %v96 = vrot.slane %v89, 2
    %v97 = vrot.slane %v89, 4
    %v98 = vrot.slane %v89, 6
    %v99 = vrot.slane %v92, 2
    %v100 = vrot.slane %v92, 4
    %v101 = vrot.slane %v92, 6
    %vm108 = vcmask 254976
    %109 = vst.msk [vmem:[#allocation2] sm:$0x3] %vm108, %v89
    %110 = vst.msk [vmem:[#allocation2 + $0x2] sm:$0x3] %vm108, %v96
    %111 = vst.msk [vmem:[#allocation2 + $0x4] sm:$0x3] %vm108, %v97
    %112 = vst.msk [vmem:[#allocation2 + $0x6] sm:$0x3] %vm108, %v98
    %113 = vst.msk [vmem:[#allocation2 + $0x8] sm:$0x3] %vm108, %v92
    %114 = vst.msk [vmem:[#allocation2 + $0xa] sm:$0x3] %vm108, %v99
    %115 = vst.msk [vmem:[#allocation2 + $0xc] sm:$0x3] %vm108, %v100
    %116 = vst.msk [vmem:[#allocation2 + $0xe] sm:$0x3] %vm108, %v101
    %v117 = vld [vmem:[#allocation2] sm:$0x3]
    %v118 = vld [vmem:[%s2] sm:$0xff]
    %v119 = vld [vmem:[%s2 + $0x8] sm:$0xff]
    %v120 = vld [vmem:[%s2 + $0x10] sm:$0xff]
    %v121 = vld [vmem:[%s2 + $0x18] sm:$0xff]
    %vm122 = vcmask 261120
    %v124 = vsel %vm122, 0.0, 0
    %126 = vmatpush.msra.mxu0 0.0
    %127 = vmatpush.msra.mxu0 0.0
    %128 = vmatpush.msra.mxu0 0.0
    %129 = vmatpush.msra.mxu0 0.0
    %130 = vmatpush.msra.mxu0 0.0
    %131 = vmatpush.msra.mxu0 0.0
    %132 = vmatpush.msra.mxu0 0.0
    %133 = vmatpush.msra.mxu0 0.0
    %134 = vmatpush.msra.mxu0 0.0
    %135 = vmatpush.msra.mxu0 0.0
    %136 = vmatpush.msra.mxu0 0.0
    %137 = vmatpush.msra.mxu0 0.0
    %138 = vmatpush.msra.mxu0 %v121
    %139 = vmatpush.msra.mxu0 %v120
    %140 = vmatpush.msra.mxu0 %v119
    %141 = vmatpush.msra.mxu0 %v118
    %142 = vmatmul.f32.gmra.mxu0 %v124
    %v143 = vpop.f32.mrf.mxu0
    %v144 = vadd.f32 0.0, %v143
    %145 = vdwg.mxu0
    %v146 = vadd.f32 %v117, %v144
    %v147 = vtanh.pop %v146
    %s148 = scalar_lea.vmem [#allocation2], 2
    %v149 = vld [vmem:[%s148] sm:$0x3]
    %v151 = vsel %vm122, %v147, 0
    %153 = vmatpush.msra.mxu0 0.0
    %154 = vmatpush.msra.mxu0 0.0
    %155 = vmatpush.msra.mxu0 0.0
    %156 = vmatpush.msra.mxu0 0.0
    %157 = vmatpush.msra.mxu0 0.0
    %158 = vmatpush.msra.mxu0 0.0
    %159 = vmatpush.msra.mxu0 0.0
    %160 = vmatpush.msra.mxu0 0.0
    %161 = vmatpush.msra.mxu0 0.0
    %162 = vmatpush.msra.mxu0 0.0
    %163 = vmatpush.msra.mxu0 0.0
    %164 = vmatpush.msra.mxu0 0.0
    %165 = vmatpush.msra.mxu0 %v121
    %166 = vmatpush.msra.mxu0 %v120
    %167 = vmatpush.msra.mxu0 %v119
    %168 = vmatpush.msra.mxu0 %v118
    %169 = vmatmul.f32.gmra.mxu0 %v151
    %v170 = vpop.f32.mrf.mxu0
    %v171 = vadd.f32 0.0, %v170
    %172 = vdwg.mxu0
    %v173 = vadd.f32 %v149, %v171
    %v174 = vtanh.pop %v173
    %s175 = scalar_lea.vmem [#allocation2], 4
    %v176 = vld [vmem:[%s175] sm:$0x3]
    %v178 = vsel %vm122, %v174, 0
    %180 = vmatpush.msra.mxu0 0.0
    %181 = vmatpush.msra.mxu0 0.0
    %182 = vmatpush.msra.mxu0 0.0
    %183 = vmatpush.msra.mxu0 0.0
    %184 = vmatpush.msra.mxu0 0.0
    %185 = vmatpush.msra.mxu0 0.0
    %186 = vmatpush.msra.mxu0 0.0
    %187 = vmatpush.msra.mxu0 0.0
    %188 = vmatpush.msra.mxu0 0.0
    %189 = vmatpush.msra.mxu0 0.0
    %190 = vmatpush.msra.mxu0 0.0
    %191 = vmatpush.msra.mxu0 0.0
    %192 = vmatpush.msra.mxu0 %v121
    %193 = vmatpush.msra.mxu0 %v120
    %194 = vmatpush.msra.mxu0 %v119
    %195 = vmatpush.msra.mxu0 %v118
    %196 = vmatmul.f32.gmra.mxu0 %v178
    %v197 = vpop.f32.mrf.mxu0
    %v198 = vadd.f32 0.0, %v197
    %199 = vdwg.mxu0
    %v200 = vadd.f32 %v176, %v198
    %v201 = vtanh.pop %v200
    %s202 = scalar_lea.vmem [#allocation2], 6
    %v203 = vld [vmem:[%s202] sm:$0x3]
    %v205 = vsel %vm122, %v201, 0
    %207 = vmatpush.msra.mxu0 0.0
    %208 = vmatpush.msra.mxu0 0.0
    %209 = vmatpush.msra.mxu0 0.0
    %210 = vmatpush.msra.mxu0 0.0
    %211 = vmatpush.msra.mxu0 0.0
    %212 = vmatpush.msra.mxu0 0.0
    %213 = vmatpush.msra.mxu0 0.0
    %214 = vmatpush.msra.mxu0 0.0
    %215 = vmatpush.msra.mxu0 0.0
    %216 = vmatpush.msra.mxu0 0.0
    %217 = vmatpush.msra.mxu0 0.0
    %218 = vmatpush.msra.mxu0 0.0
    %219 = vmatpush.msra.mxu0 %v121
    %220 = vmatpush.msra.mxu0 %v120
    %221 = vmatpush.msra.mxu0 %v119
    %222 = vmatpush.msra.mxu0 %v118
    %223 = vmatmul.f32.gmra.mxu0 %v205
    %v224 = vpop.f32.mrf.mxu0
    %v225 = vadd.f32 0.0, %v224
    %226 = vdwg.mxu0
    %v227 = vadd.f32 %v203, %v225
    %v228 = vtanh.pop %v227
    %s229 = scalar_lea.vmem [#allocation2], 8
    %v230 = vld [vmem:[%s229] sm:$0x3]
    %v232 = vsel %vm122, %v228, 0
    %234 = vmatpush.msra.mxu0 0.0
    %235 = vmatpush.msra.mxu0 0.0
    %236 = vmatpush.msra.mxu0 0.0
    %237 = vmatpush.msra.mxu0 0.0
    %238 = vmatpush.msra.mxu0 0.0
    %239 = vmatpush.msra.mxu0 0.0
    %240 = vmatpush.msra.mxu0 0.0
    %241 = vmatpush.msra.mxu0 0.0
    %242 = vmatpush.msra.mxu0 0.0
    %243 = vmatpush.msra.mxu0 0.0
    %244 = vmatpush.msra.mxu0 0.0
    %245 = vmatpush.msra.mxu0 0.0
    %246 = vmatpush.msra.mxu0 %v121
    %247 = vmatpush.msra.mxu0 %v120
    %248 = vmatpush.msra.mxu0 %v119
    %249 = vmatpush.msra.mxu0 %v118
    %250 = vmatmul.f32.gmra.mxu0 %v232
    %v251 = vpop.f32.mrf.mxu0
    %v252 = vadd.f32 0.0, %v251
    %253 = vdwg.mxu0
    %v254 = vadd.f32 %v230, %v252
    %v255 = vtanh.pop %v254
    %s256 = scalar_lea.vmem [#allocation2], 10
    %v257 = vld [vmem:[%s256] sm:$0x3]
    %v259 = vsel %vm122, %v255, 0
    %261 = vmatpush.msra.mxu0 0.0
    %262 = vmatpush.msra.mxu0 0.0
    %263 = vmatpush.msra.mxu0 0.0
    %264 = vmatpush.msra.mxu0 0.0
    %265 = vmatpush.msra.mxu0 0.0
    %266 = vmatpush.msra.mxu0 0.0
    %267 = vmatpush.msra.mxu0 0.0
    %268 = vmatpush.msra.mxu0 0.0
    %269 = vmatpush.msra.mxu0 0.0
    %270 = vmatpush.msra.mxu0 0.0
    %271 = vmatpush.msra.mxu0 0.0
    %272 = vmatpush.msra.mxu0 0.0
    %273 = vmatpush.msra.mxu0 %v121
    %274 = vmatpush.msra.mxu0 %v120
    %275 = vmatpush.msra.mxu0 %v119
    %276 = vmatpush.msra.mxu0 %v118
    %277 = vmatmul.f32.gmra.mxu0 %v259
    %v278 = vpop.f32.mrf.mxu0
    %v279 = vadd.f32 0.0, %v278
    %280 = vdwg.mxu0
    %v281 = vadd.f32 %v257, %v279
    %v282 = vtanh.pop %v281
    %s283 = scalar_lea.vmem [#allocation2], 12
    %v284 = vld [vmem:[%s283] sm:$0x3]
    %v286 = vsel %vm122, %v282, 0
    %288 = vmatpush.msra.mxu0 0.0
    %289 = vmatpush.msra.mxu0 0.0
    %290 = vmatpush.msra.mxu0 0.0
    %291 = vmatpush.msra.mxu0 0.0
    %292 = vmatpush.msra.mxu0 0.0
    %293 = vmatpush.msra.mxu0 0.0
    %294 = vmatpush.msra.mxu0 0.0
    %295 = vmatpush.msra.mxu0 0.0
    %296 = vmatpush.msra.mxu0 0.0
    %297 = vmatpush.msra.mxu0 0.0
    %298 = vmatpush.msra.mxu0 0.0
    %299 = vmatpush.msra.mxu0 0.0
    %300 = vmatpush.msra.mxu0 %v121
    %301 = vmatpush.msra.mxu0 %v120
    %302 = vmatpush.msra.mxu0 %v119
    %303 = vmatpush.msra.mxu0 %v118
    %304 = vmatmul.f32.gmra.mxu0 %v286
    %v305 = vpop.f32.mrf.mxu0
    %v306 = vadd.f32 0.0, %v305
    %307 = vdwg.mxu0
    %v308 = vadd.f32 %v284, %v306
    %v309 = vtanh.pop %v308
    %s310 = scalar_lea.vmem [#allocation2], 14
    %v311 = vld [vmem:[%s310] sm:$0x3]
    %v313 = vsel %vm122, %v309, 0
    %315 = vmatpush.msra.mxu0 0.0
    %316 = vmatpush.msra.mxu0 0.0
    %317 = vmatpush.msra.mxu0 0.0
    %318 = vmatpush.msra.mxu0 0.0
    %319 = vmatpush.msra.mxu0 0.0
    %320 = vmatpush.msra.mxu0 0.0
    %321 = vmatpush.msra.mxu0 0.0
    %322 = vmatpush.msra.mxu0 0.0
    %323 = vmatpush.msra.mxu0 0.0
    %324 = vmatpush.msra.mxu0 0.0
    %325 = vmatpush.msra.mxu0 0.0
    %326 = vmatpush.msra.mxu0 0.0
    %327 = vmatpush.msra.mxu0 %v121
    %328 = vmatpush.msra.mxu0 %v120
    %329 = vmatpush.msra.mxu0 %v119
    %330 = vmatpush.msra.mxu0 %v118
    %331 = vmatmul.f32.gmra.mxu0 %v313
    %v332 = vpop.f32.mrf.mxu0
    %v333 = vadd.f32 0.0, %v332
    %334 = vdwg.mxu0
    %v335 = vadd.f32 %v311, %v333
    %v336 = vtanh.pop %v335
    %v337 = vld [vmem:[%s4] sm:$0xff]
    %v338 = vld [vmem:[%s4 + $0x8] sm:$0xff]
    %v339 = vld [vmem:[%s4 + $0x10] sm:$0xff]
    %v340 = vld [vmem:[%s4 + $0x18] sm:$0xff]
    %v341 = vld [vmem:[%s5] sm:$0x1]
    %v343 = vperm.slane %v341, 0
    %v346 = vsel %vm122, %v336, 0
    %348 = vmatpush.msra.mxu0 0.0
    %349 = vmatpush.msra.mxu0 0.0
    %350 = vmatpush.msra.mxu0 0.0
    %351 = vmatpush.msra.mxu0 0.0
    %352 = vmatpush.msra.mxu0 0.0
    %353 = vmatpush.msra.mxu0 0.0
    %354 = vmatpush.msra.mxu0 0.0
    %355 = vmatpush.msra.mxu0 0.0
    %356 = vmatpush.msra.mxu0 0.0
    %357 = vmatpush.msra.mxu0 0.0
    %358 = vmatpush.msra.mxu0 0.0
    %359 = vmatpush.msra.mxu0 0.0
    %360 = vmatpush.msra.mxu0 %v340
    %361 = vmatpush.msra.mxu0 %v339
    %362 = vmatpush.msra.mxu0 %v338
    %363 = vmatpush.msra.mxu0 %v337
    %364 = vmatmul.f32.gmra.mxu0 %v346
    %v365 = vpop.f32.mrf.mxu0
    %v366 = vadd.f32 %v343, %v365
    %367 = vdwg.mxu0
    %vm368 = vcmask 58368
    %369 = vst.msk [vmem:[#allocation3] sm:$0x3] %vm368, %v366
    // Predicated region
    $region26: #{tpu_custom_call.1} parent=1 // pred_check
      _
    $region27: #{tpu_custom_call.1} parent=1 // pred_check_branch
      %371 = sbr.rel (0) target = $region29
    $region28: #{tpu_custom_call.1} parent=1 // pred_region
      %373 = vsyncadd [#allocation4], 0
      %s375 = sshll.u32 [#allocation3], 4
      %s376 = int_to_ptr.vmem [resolvable:$true] %s375
      %s377 = sshll.u32 %s6, 4
      %s378 = int_to_ptr.hbm [resolvable:$true] %s377
      %380 = dma.vmem_to_hbm [thread:$0]  %s376, 32, %s378, [#allocation4]
    $region29: #{tpu_custom_call.1} parent=1 // pred_fallthru
      _
    // Predicated region
    $region30: #{tpu_custom_call.1} parent=1 // pred_check
      _
    $region31: #{tpu_custom_call.1} parent=1 // pred_check_branch
      %382 = sbr.rel (0) target = $region33
    $region32: #{tpu_custom_call.1} parent=1 // pred_region
      %384 = dma.done [#allocation4], 32
    $region33: #{tpu_custom_call.1} parent=1 // pred_fallthru
      _
    %385 = vsyncpa [#allocation4], 1

</llo_original>
